<compile_context>
chip_gen: v5e
topology: v5e:2x2
jax: 0.10.0
libtpu: 0.0.40
codegen_flags: <defaults>
</compile_context>

<pallas_src>
import functools

import jax
import jax.numpy as jnp
from jax.experimental import pallas as pl
from jax.experimental.pallas import tpu as pltpu


def _round_up(x, m):
    return (x + m - 1) // m * m


def _default_vmem_limit():
    # ~96 MiB on v5e/v6e (128 MiB physical), ~48 MiB on v7x (64 MiB physical).
    try:
        cap = pltpu.get_tpu_info().vmem_capacity_bytes
        return min(int(cap) * 3 // 4, 100 * 1024 * 1024)
    except Exception:
        return 48 * 1024 * 1024


_VMEM_LIMIT = _default_vmem_limit()


# ----------------------------------------------------------------------------
# Tiled dense (matmul + bias + activation)
# ----------------------------------------------------------------------------
def _dense_kernel_single(x_ref, w_ref, *rest, act, has_bias):
    # Single K block: no accumulator scratch, direct write.
    if has_bias:
        b_ref, o_ref = rest
    else:
        (o_ref,) = rest
    y = jnp.dot(x_ref[...], w_ref[...], preferred_element_type=jnp.float32)
    if has_bias:
        y = y + b_ref[...]
    if act == "relu":
        y = jnp.maximum(y, 0.0)
    elif act == "tanh":
        y = jnp.tanh(y)
    o_ref[...] = y


def _dense_kernel_ktiled(x_ref, w_ref, *rest, act, has_bias):
    if has_bias:
        b_ref, o_ref, acc_ref = rest
    else:
        o_ref, acc_ref = rest

    @pl.when(pl.program_id(2) == 0)
    def _():
        acc_ref[...] = jnp.zeros_like(acc_ref)

    acc_ref[...] += jnp.dot(x_ref[...], w_ref[...],
                            preferred_element_type=jnp.float32)

    @pl.when(pl.program_id(2) == pl.num_programs(2) - 1)
    def _():
        y = acc_ref[...]
        if has_bias:
            y = y + b_ref[...]
        if act == "relu":
            y = jnp.maximum(y, 0.0)
        elif act == "tanh":
            y = jnp.tanh(y)
        o_ref[...] = y


def dense(x, w, b=None, act=None, tm=256, tn=512, tk=512):
    """(M, K) @ (K, N) (+ bias, activation), bf16 MXU inputs, f32 accumulation.

    If K fits one tile (every matmul in this model) the K grid axis and the f32
    accumulator scratch are skipped and the grid is fully parallel.
    """
    m, k = x.shape
    kw, n = w.shape
    assert k == kw
    tm = min(tm, _round_up(m, 8))
    tn = min(tn, _round_up(n, 128))
    tk = min(tk, _round_up(k, 128))
    m_p, n_p, k_p = _round_up(m, tm), _round_up(n, tn), _round_up(k, tk)

    # pad in bf16 directly (no f32 round-trip through HBM)
    xp = jnp.pad(x.astype(jnp.bfloat16), ((0, m_p - m), (0, k_p - k)))
    wp = jnp.pad(w.astype(jnp.bfloat16), ((0, k_p - k), (0, n_p - n)))
    has_bias = b is not None
    if has_bias:
        bias_p = jnp.pad(b.astype(jnp.float32), (0, n_p - n)).reshape(1, n_p)

    if k_p == tk:
        in_specs = [pl.BlockSpec((tm, tk), lambda i, j: (i, 0)),
                    pl.BlockSpec((tk, tn), lambda i, j: (0, j))]
        args = [xp, wp]
        if has_bias:
            in_specs.append(pl.BlockSpec((1, tn), lambda i, j: (0, j)))
            args.append(bias_p)
        out = pl.pallas_call(
            functools.partial(_dense_kernel_single, act=act, has_bias=has_bias),
            out_shape=jax.ShapeDtypeStruct((m_p, n_p), jnp.float32),
            grid=(m_p // tm, n_p // tn),
            in_specs=in_specs,
            out_specs=pl.BlockSpec((tm, tn), lambda i, j: (i, j)),
            compiler_params=pltpu.CompilerParams(
                dimension_semantics=("parallel", "parallel"),
                vmem_limit_bytes=_VMEM_LIMIT),
        )(*args)
    else:
        in_specs = [pl.BlockSpec((tm, tk), lambda i, j, kk: (i, kk)),
                    pl.BlockSpec((tk, tn), lambda i, j, kk: (kk, j))]
        args = [xp, wp]
        if has_bias:
            in_specs.append(pl.BlockSpec((1, tn), lambda i, j, kk: (0, j)))
            args.append(bias_p)
        out = pl.pallas_call(
            functools.partial(_dense_kernel_ktiled, act=act, has_bias=has_bias),
            out_shape=jax.ShapeDtypeStruct((m_p, n_p), jnp.float32),
            grid=(m_p // tm, n_p // tn, k_p // tk),
            in_specs=in_specs,
            out_specs=pl.BlockSpec((tm, tn), lambda i, j, kk: (i, j)),
            scratch_shapes=[pltpu.VMEM((tm, tn), jnp.float32)],
            compiler_params=pltpu.CompilerParams(
                dimension_semantics=("parallel", "parallel", "arbitrary"),
                vmem_limit_bytes=_VMEM_LIMIT),
        )(*args)
    return out[:m, :n]


# ----------------------------------------------------------------------------
# Bidirectional GRU recurrence (both directions fused; ONE hidden matmul / step)
# ----------------------------------------------------------------------------
def _bigru_kernel(xwf_ref, xwb_ref, wh_ref, bh_ref, of_ref, ob_ref, h_ref):
    tt = xwf_ref.shape[0]
    hid = of_ref.shape[-1]
    h3 = 3 * hid

    @pl.when(pl.program_id(0) == 0)
    def _():
        h_ref[...] = jnp.zeros_like(h_ref)

    wh = wh_ref[...]        # (2H, 6H) block-diagonal
    bh = bh_ref[...]        # (1, 6H)

    def gates(xw, hu, h):
        # PyTorch GRU: n = tanh(W_in x + b_in + r * (W_hn h + b_hn)); bh is in hu.
        r = jax.nn.sigmoid(xw[:, :hid] + hu[:, :hid])
        z = jax.nn.sigmoid(xw[:, hid:2 * hid] + hu[:, hid:2 * hid])
        n = jnp.tanh(xw[:, 2 * hid:] + r * hu[:, 2 * hid:])
        return (1.0 - z) * n + z * h

    def body(s, carry):
        h = h_ref[...]                                       # (bp, 2H) = [h_fwd | h_bwd]
        hu = jnp.dot(h.astype(jnp.bfloat16), wh,
                     preferred_element_type=jnp.float32) + bh  # one MXU push / step
        hf_new = gates(xwf_ref[s], hu[:, :h3], h[:, :hid])
        hb_new = gates(xwb_ref[tt - 1 - s], hu[:, h3:], h[:, hid:])
        h_ref[:, :hid] = hf_new
        h_ref[:, hid:] = hb_new
        of_ref[s] = hf_new
        ob_ref[tt - 1 - s] = hb_new
        return carry

    jax.lax.fori_loop(0, tt, body, 0, unroll=True)


def _bigru_call(xw_f, xw_b, wh_blk, bh_cat, tt):
    tp, bp, h3 = xw_f.shape
    hid = h3 // 3
    nblk = tp // tt
    out_shape = (jax.ShapeDtypeStruct((tp, bp, hid), jnp.float32),
                 jax.ShapeDtypeStruct((tp, bp, hid), jnp.float32))
    return pl.pallas_call(
        _bigru_kernel,
        out_shape=out_shape,
        grid=(nblk,),
        in_specs=[
            pl.BlockSpec((tt, bp, h3), lambda i: (i, 0, 0)),
            pl.BlockSpec((tt, bp, h3), lambda i: (nblk - 1 - i, 0, 0)),
            pl.BlockSpec((2 * hid, 2 * h3), lambda i: (0, 0)),
            pl.BlockSpec((1, 2 * h3), lambda i: (0, 0)),
        ],
        out_specs=[
            pl.BlockSpec((tt, bp, hid), lambda i: (i, 0, 0)),
            pl.BlockSpec((tt, bp, hid), lambda i: (nblk - 1 - i, 0, 0)),
        ],
        scratch_shapes=[pltpu.VMEM((bp, 2 * hid), jnp.float32)],
        compiler_params=pltpu.CompilerParams(
            dimension_semantics=("arbitrary",),   # sequential recurrence; must not shard
            vmem_limit_bytes=_VMEM_LIMIT),
    )(xw_f, xw_b, wh_blk, bh_cat)


def bigru(x_btf, p_fwd, p_bwd, tt=32):
    """(B, T, F) -> (B, T, 2H).  Both directions in one kernel, one hidden matmul
    per timestep via a block-diagonal (2H, 6H) weight; backward direction addressed
    with reversed block index_maps (no [::-1] HBM copies).
    """
    bsz, t_len, feat = x_btf.shape
    wx_f, wh_f, bx_f, bh_f = p_fwd
    wx_b, wh_b, bx_b, bh_b = p_bwd
    hid = wh_f.shape[0]
    h3 = 3 * hid

    # single fused input projection for both directions (MXU-efficient M = B*T)
    wx_cat = jnp.concatenate([wx_f, wx_b], axis=1)                 # (F, 6H)
    bx_cat = jnp.concatenate([bx_f, bx_b], axis=0)                 # (6H,)
    xw = dense(x_btf.reshape(bsz * t_len, feat), wx_cat, bx_cat)   # (B*T, 6H)
    xw = xw.reshape(bsz, t_len, 2 * h3)
    xw_f = jnp.transpose(xw[..., :h3], (1, 0, 2))                  # (T, B, 3H)
    xw_b = jnp.transpose(xw[..., h3:], (1, 0, 2))

    tt = min(tt, t_len)
    tp = _round_up(t_len, tt)
    pad_t = tp - t_len
    bp = _round_up(bsz, 8)
    pad_b = bp - bsz
    # backward padding at the FRONT so the reversed scan sees real frames first
    xw_f = jnp.pad(xw_f, ((0, pad_t), (0, pad_b), (0, 0)))
    xw_b = jnp.pad(xw_b, ((pad_t, 0), (0, pad_b), (0, 0)))

    # block-diagonal hidden weight: [hf|hb] @ blkdiag(Wh_f, Wh_b) = [hf@Wh_f | hb@Wh_b]
    wh_blk = jnp.zeros((2 * hid, 2 * h3), jnp.bfloat16)
    wh_blk = wh_blk.at[:hid, :h3].set(wh_f.astype(jnp.bfloat16))
    wh_blk = wh_blk.at[hid:, h3:].set(wh_b.astype(jnp.bfloat16))
    bh_cat = jnp.concatenate([bh_f, bh_b], axis=0).reshape(1, 2 * h3).astype(jnp.float32)

    # TODO(synk): on v7x the two directions could be split across the 2 TensorCores
    # (leading parallel grid axis / core_map) for ~2x on the recurrence.
    out_f, out_b = _bigru_call(xw_f, xw_b, wh_blk, bh_cat, tt)
    out_f = out_f[:t_len, :bsz]
    out_b = out_b[pad_t:, :bsz]
    return jnp.transpose(jnp.concatenate([out_f, out_b], axis=-1), (1, 0, 2))


# ----------------------------------------------------------------------------
# 1-D 'same' conv (kernel size 3), tiled over time (3 shifted views, bf16 blocks)
# ----------------------------------------------------------------------------
def _conv3_kernel(x0_ref, x1_ref, x2_ref, w_ref, b_ref, o_ref, *, act):
    tt, bp, cin = x0_ref.shape
    cout = o_ref.shape[-1]
    acc = jnp.dot(x0_ref[...].reshape(tt * bp, cin), w_ref[0],
                  preferred_element_type=jnp.float32)
    acc = acc + jnp.dot(x1_ref[...].reshape(tt * bp, cin), w_ref[1],
                        preferred_element_type=jnp.float32)
    acc = acc + jnp.dot(x2_ref[...].reshape(tt * bp, cin), w_ref[2],
                        preferred_element_type=jnp.float32)
    acc = acc + b_ref[...]
    if act == "relu":
        acc = jnp.maximum(acc, 0.0)
    o_ref[...] = acc.reshape(tt, bp, cout)


def conv1d_same3(x_btc, w_kio, bias, act=None, tt=256):
    """x: (B, T, Cin), w: (3, Cin_pad, Cout_pad) -> (B, T, Cout_pad).

    Tiled over time so VMEM footprint is independent of T (length-robust on v7x's
    64 MiB VMEM) and DMA overlaps compute.  No im2col in HBM.
    """
    bsz, t_len, cin = x_btc.shape
    _, cin_p, cout_p = w_kio.shape
    bp = _round_up(bsz, 8)
    tt = min(tt, t_len)
    tp = _round_up(t_len, tt)

    x_tm = jnp.transpose(x_btc, (1, 0, 2)).astype(jnp.bfloat16)        # time-major, bf16
    x_pad = jnp.pad(x_tm, ((1, 1 + tp - t_len), (0, bp - bsz), (0, cin_p - cin)))
    x0, x1, x2 = x_pad[:tp], x_pad[1:tp + 1], x_pad[2:tp + 2]          # shifted views

    blk_in = pl.BlockSpec((tt, bp, cin_p), lambda i: (i, 0, 0))
    out = pl.pallas_call(
        functools.partial(_conv3_kernel, act=act),
        out_shape=jax.ShapeDtypeStruct((tp, bp, cout_p), jnp.float32),
        grid=(tp // tt,),
        in_specs=[blk_in, blk_in, blk_in,
                  pl.BlockSpec((3, cin_p, cout_p), lambda i: (0, 0, 0)),
                  pl.BlockSpec((1, cout_p), lambda i: (0, 0))],
        out_specs=pl.BlockSpec((tt, bp, cout_p), lambda i: (i, 0, 0)),
        compiler_params=pltpu.CompilerParams(
            dimension_semantics=("parallel",),
            vmem_limit_bytes=_VMEM_LIMIT),
    )(x0, x1, x2, w_kio.astype(jnp.bfloat16),
      bias.astype(jnp.float32).reshape(1, cout_p))
    return jnp.transpose(out[:t_len, :bsz, :], (1, 0, 2))              # (B, T, Cout_pad)


# ----------------------------------------------------------------------------
# Fused mel-decoder step (attn GRU -> attention -> dec GRU); prenet, attention-GRU
# input projection and frame projection are hoisted to batched dense() calls.
# ----------------------------------------------------------------------------
def _mel_decoder_step_kernel(
        xw_ref, encv_ref, encp_ref,
        awh_ref, abh_ref, wqd_ref, v_ref,
        diwc_ref, dib_ref,
        dwx_ref, dwh_ref, dbx_ref, dbh_ref,
        out_ref, attn_h_ref, dec_h_ref):

    hid = attn_h_ref.shape[-1]
    attn_dim = encp_ref.shape[-1]

    @pl.when(pl.program_id(0) == 0)
    def _():
        attn_h_ref[...] = jnp.zeros_like(attn_h_ref)
        dec_h_ref[...] = jnp.zeros_like(dec_h_ref)

    def mm(a, w_ref_):
        return jnp.dot(a.astype(jnp.bfloat16), w_ref_[...],
                       preferred_element_type=jnp.float32)

    def gru_from(xw, hu, h):
        r = jax.nn.sigmoid(xw[:, :hid] + hu[:, :hid])
        z = jax.nn.sigmoid(xw[:, hid:2 * hid] + hu[:, hid:2 * hid])
        n = jnp.tanh(xw[:, 2 * hid:] + r * hu[:, 2 * hid:])
        return (1.0 - z) * n + z * h

    # ---- attention GRU (input projection hoisted; xw_ref holds x@Wx + bx) ----
    attn_h_old = attn_h_ref[...]
    hu_a = mm(attn_h_old, awh_ref) + abh_ref[...]
    attn_h = gru_from(xw_ref[...], hu_a, attn_h_old)
    attn_h_ref[...] = attn_h

    # ---- fused query + decoder-input(attn half) projection from new attn state ----
    qd = mm(attn_h, wqd_ref)                           # (bp, attn_dim + hid)
    q = qd[:, :attn_dim]
    din_a = qd[:, attn_dim:]

    # ---- additive attention over the VMEM-resident encoder memory ----
    # TODO(synk): on v6e/v7x the tanh/exp could run in bf16 for ~2x EUP throughput
    # (kept f32 for v5e compatibility / parity).
    e = jnp.tanh(encp_ref[...] + q[:, None, :])        # (bp, T_enc, A)
    scores = jnp.sum(e * v_ref[...], axis=-1)          # (bp, T_enc)
    scores = scores - jnp.max(scores, axis=-1, keepdims=True)
    p = jnp.exp(scores)
    p = p * pl.reciprocal(jnp.sum(p, axis=-1, keepdims=True), approx=True)
    # context on the MXU (batched contraction) instead of a VPU mul + XLU reduce
    ctx = jax.lax.dot_general(
        p[:, None, :].astype(jnp.bfloat16), encv_ref[...],
        dimension_numbers=(((2,), (1,)), ((0,), (0,))),
        preferred_element_type=jnp.float32)[:, 0, :]   # (bp, enc_out)

    # ---- decoder input (split weight: no in-kernel lane-concatenate) ----
    dec_in = din_a + mm(ctx, diwc_ref) + dib_ref[...]

    # ---- decoder GRU; dec_h is the kernel output (frame proj hoisted) ----
    dec_h_old = dec_h_ref[...]
    xw_d = mm(dec_in, dwx_ref) + dbx_ref[...]
    hu_d = mm(dec_h_old, dwh_ref) + dbh_ref[...]
    dec_h = gru_from(xw_d, hu_d, dec_h_old)
    dec_h_ref[...] = dec_h
    out_ref[...] = dec_h


def _resident_spec(shape):
    ndim = len(shape)
    return pl.BlockSpec(shape, lambda t: (0,) * ndim)


# ----------------------------------------------------------------------------
# Tacotron module
# ----------------------------------------------------------------------------
class TacotronPallas:
    def __init__(self, voca_size, emb_dim=256, enc_hidden_dim=128, proj_dim=128,
                 num_mel=80, dec_hidden_dim=256, reduction_factor=5, num_freq=1024,
                 attn_dim=256, seed=0):
        self.voca_size = voca_size
        self.emb_dim = emb_dim
        self.enc_hidden = enc_hidden_dim
        self.proj_dim = proj_dim
        self.num_mel = num_mel
        self.dec_hidden = dec_hidden_dim
        self.r = reduction_factor
        self.num_freq = num_freq
        self.attn_dim = attn_dim
        self.num_mel_pad = _round_up(num_mel, 128)                     # 80 -> 128
        self.dec_out_pad = _round_up(num_mel * reduction_factor, 128)  # 400 -> 512

        key = jax.random.PRNGKey(seed)
        ks = iter(jax.random.split(key, 64))

        def w(shape):                                   # bf16 weights (MXU-native)
            return (jax.random.normal(next(ks), shape) * 0.08).astype(jnp.bfloat16)

        def zf(shape):                                  # f32 biases
            return jnp.zeros(shape, jnp.float32)

        def gru_p(din, h):
            return (w((din, 3 * h)), w((h, 3 * h)), zf((3 * h,)), zf((3 * h,)))

        # ---- Encoder: embedding + prenet + BiGRU ----
        # TODO(synk): exact CBHG (conv-bank / highway) internals not given; approximated.
        self.emb = (jax.random.normal(next(ks), (voca_size, emb_dim)) * 0.08).astype(jnp.float32)
        self.enc_pre1_w, self.enc_pre1_b = w((emb_dim, proj_dim)), zf((proj_dim,))
        self.enc_pre2_w, self.enc_pre2_b = w((proj_dim, proj_dim)), zf((proj_dim,))
        self.enc_gru_f = gru_p(proj_dim, enc_hidden_dim)
        self.enc_gru_b = gru_p(proj_dim, enc_hidden_dim)
        enc_out = 2 * enc_hidden_dim

        # ---- Mel decoder: prenet + attention GRU + decoder GRU + frame proj ----
        self.dec_pre1_w, self.dec_pre1_b = w((self.num_mel_pad, dec_hidden_dim)), zf((dec_hidden_dim,))
        self.dec_pre2_w, self.dec_pre2_b = w((dec_hidden_dim, proj_dim)), zf((proj_dim,))
        self.attn_rnn = gru_p(proj_dim, dec_hidden_dim)
        self.attn_wq = w((dec_hidden_dim, attn_dim))
        self.attn_wenc = w((enc_out, attn_dim))
        self.attn_v = (jax.random.normal(next(ks), (attn_dim,)) * 0.08).astype(jnp.float32)
        self.dec_in_w, self.dec_in_b = w((dec_hidden_dim + enc_out, dec_hidden_dim)), zf((dec_hidden_dim,))
        self.dec_rnn = gru_p(dec_hidden_dim, dec_hidden_dim)
        self.dec_out_w, self.dec_out_b = w((dec_hidden_dim, self.dec_out_pad)), zf((self.dec_out_pad,))

        # ---- Post-processing: conv stack + BiGRU + linear to num_freq ----
        self.post_c1_w = w((3, self.num_mel_pad, enc_hidden_dim))      # (K, Cin_pad, Cout)
        self.post_c1_b = zf((enc_hidden_dim,))
        self.post_c2_w = w((3, enc_hidden_dim, self.num_mel_pad))
        self.post_c2_b = zf((self.num_mel_pad,))
        self.post_gru_f = gru_p(num_mel, enc_hidden_dim)
        self.post_gru_b = gru_p(num_mel, enc_hidden_dim)
        self.post_lin_w, self.post_lin_b = w((2 * enc_hidden_dim, num_freq)), zf((num_freq,))

    # -- Encoder ---------------------------------------------------------------
    def encoder(self, text):
        bsz, t_len = text.shape
        emb = jnp.take(self.emb, text, axis=0)                       # (B, T, emb)
        flat = emb.reshape(bsz * t_len, self.emb_dim)
        # TODO(synk): prenet dropout omitted (train-only stochastic op).
        h = dense(flat, self.enc_pre1_w, self.enc_pre1_b, act="relu")
        h = dense(h, self.enc_pre2_w, self.enc_pre2_b, act="relu")
        return bigru(h.reshape(bsz, t_len, self.proj_dim),
                     self.enc_gru_f, self.enc_gru_b)                 # (B, T, 256)

    # -- Mel decoder -------------------------------------------------------------
    def mel_decoder(self, enc_vec, mel, is_train=True):
        # TODO(synk): is_train is ignored — always teacher-forced; no autoregressive
        # inference path, and decoder prenet dropout is omitted.
        bsz, t_enc, e_dim = enc_vec.shape
        t_mel = mel.shape[1]
        t_dec = t_mel // self.r
        bp = _round_up(bsz, 8)

        # encoder-memory projection for additive attention (tiled dense, no bias)
        enc_proj = dense(enc_vec.reshape(bsz * t_enc, e_dim), self.attn_wenc)
        enc_proj = enc_proj.reshape(bsz, t_enc, self.attn_dim)
        encv = jnp.pad(enc_vec.astype(jnp.bfloat16), ((0, bp - bsz), (0, 0), (0, 0)))
        encp = jnp.pad(enc_proj, ((0, bp - bsz), (0, 0), (0, 0)))

        # teacher forcing: GO frame + last frame of every reduction group
        taken = mel[:, self.r - 1::self.r, :][:, :t_dec - 1, :].astype(jnp.float32)
        dec_in = jnp.concatenate(
            [jnp.zeros((bsz, 1, self.num_mel), jnp.float32), taken], axis=1)
        dec_in = jnp.transpose(dec_in, (1, 0, 2))                    # (t_dec, B, num_mel)
        dec_in = jnp.pad(dec_in, ((0, 0), (0, bp - bsz),
                                  (0, self.num_mel_pad - self.num_mel)))

        awx, awh, abx, abh = self.attn_rnn
        dwx, dwh, dbx, dbh = self.dec_rnn

        # hoisted prenet + attention-GRU input projection (MXU-efficient M = t_dec*bp)
        flat = dec_in.reshape(t_dec * bp, self.num_mel_pad)
        h = dense(flat, self.dec_pre1_w, self.dec_pre1_b, act="relu")
        h = dense(h, self.dec_pre2_w, self.dec_pre2_b, act="relu")
        xw_attn = dense(h, awx, abx).reshape(t_dec, bp, 3 * self.dec_hidden)

        # fuse query projection with the attn half of the decoder-input projection
        wq_dia = jnp.concatenate([self.attn_wq, self.dec_in_w[:self.dec_hidden]], axis=1)
        diw_c = self.dec_in_w[self.dec_hidden:]                       # (enc_out, H)

        weights = [
            awh, abh.reshape(1, -1),
            wq_dia, self.attn_v.reshape(1, 1, -1),
            diw_c, self.dec_in_b.reshape(1, -1),
            dwx, dwh, dbx.reshape(1, -1), dbh.reshape(1, -1),
        ]
        # TODO(synk): mark resident blocks pipeline_mode=pl.Buffered(1) on v7x to
        # halve their VMEM footprint for long utterances.
        in_specs = ([pl.BlockSpec((None, bp, 3 * self.dec_hidden), lambda t: (t, 0, 0)),
                     _resident_spec(encv.shape),
                     _resident_spec(encp.shape)]
                    + [_resident_spec(a.shape) for a in weights])

        dec_h_seq = pl.pallas_call(
            _mel_decoder_step_kernel,
            out_shape=jax.ShapeDtypeStruct((t_dec, bp, self.dec_hidden), jnp.float32),
            grid=(t_dec,),
            in_specs=in_specs,
            out_specs=pl.BlockSpec((None, bp, self.dec_hidden), lambda t: (t, 0, 0)),
            scratch_shapes=[pltpu.VMEM((bp, self.dec_hidden), jnp.float32),
                            pltpu.VMEM((bp, self.dec_hidden), jnp.float32)],
            compiler_params=pltpu.CompilerParams(
                dimension_semantics=("arbitrary",),   # carries state across steps
                vmem_limit_bytes=_VMEM_LIMIT),
        )(xw_attn, encv, encp, *weights)

        # frame projection outside the serial loop (lane-dense N=512, M=t_dec*bp)
        frames = dense(dec_h_seq.reshape(t_dec * bp, self.dec_hidden),
                       self.dec_out_w, self.dec_out_b)
        frames = frames.reshape(t_dec, bp, self.dec_out_pad)[:, :bsz, :self.r * self.num_mel]
        frames = frames.reshape(t_dec, bsz, self.r, self.num_mel)
        return jnp.transpose(frames, (1, 0, 2, 3)).reshape(
            bsz, t_dec * self.r, self.num_mel)                       # (B, T_mel, 80)

    # -- Post processing ---------------------------------------------------------
    def post_processing(self, mel_t):
        # mel_t: (B, num_mel, T)  (torch NCW conv layout kept for interface parity)
        bsz = mel_t.shape[0]
        t_len = mel_t.shape[2]
        x = jnp.transpose(mel_t, (0, 2, 1))                                   # (B, T, 80)
        h = conv1d_same3(x, self.post_c1_w, self.post_c1_b, act="relu")       # (B, T, 128)
        h = conv1d_same3(h, self.post_c2_w, self.post_c2_b)[:, :, :self.num_mel]
        res = h + x                                                           # (B, T, 80)
        seq = bigru(res, self.post_gru_f, self.post_gru_b)                    # (B, T, 256)
        spec = dense(seq.reshape(bsz * t_len, 2 * self.enc_hidden),
                     self.post_lin_w, self.post_lin_b)
        return spec.reshape(bsz, t_len, self.num_freq)                        # (B, T, 1024)

    # -- Full forward (matches the torch module's forward) ------------------------
    def __call__(self, text, mel, is_train=True):
        enc_vec = self.encoder(text)
        mel_spec = self.mel_decoder(enc_vec, mel, is_train)
        mel_transpose = jnp.transpose(mel_spec, (0, 2, 1))
        spec = self.post_processing(mel_transpose)
        return mel_spec, spec


# ----------------------------------------------------------------------------
if __name__ == "__main__":
    key = jax.random.PRNGKey(0)
    k_text, k_mel = jax.random.split(key)

    B, T_TEXT, VOCA = 2, 8, 30
    R, NUM_MEL = 5, 80
    T_MEL = 2 * R  # 10 frames -> 2 decoder steps

    text = jax.random.randint(k_text, (B, T_TEXT), 0, VOCA, dtype=jnp.int32)
    mel = jax.random.normal(k_mel, (B, T_MEL, NUM_MEL), dtype=jnp.float32)

    model = TacotronPallas(voca_size=VOCA, reduction_factor=R, num_mel=NUM_MEL)
    mel_spec, spec = model(text, mel, is_train=True)
    jax.block_until_ready((mel_spec, spec))

    assert mel_spec.shape == (B, T_MEL, NUM_MEL)
    assert spec.shape == (B, T_MEL, 1024)
    print("KERNEL_OK")
</pallas_src>

<mosaic_0001>
module attributes {stable_mosaic.version = 11 : i64} {
  func.func @_dense_kernel_single(%arg0: i32, %arg1: i32, %arg2: memref<16x256xbf16, #tpu.memory_space<vmem>>, %arg3: memref<256x128xbf16, #tpu.memory_space<vmem>>, %arg4: memref<1x128xf32, #tpu.memory_space<vmem>>, %arg5: memref<16x128xf32, #tpu.memory_space<vmem>>) attributes {dimension_semantics = [#tpu.dimension_semantics<parallel>, #tpu.dimension_semantics<parallel>], iteration_bounds = array<i64: 1, 1>, scalar_prefetch = 0 : i64, scratch_operands = 0 : i64, tpu.core_type = #tpu.core_type<tc>, window_params = [{transform_indices = @transform_0, window_bounds = array<i64: 16, 256>}, {transform_indices = @transform_1, window_bounds = array<i64: 256, 128>}, {transform_indices = @transform_2, window_bounds = array<i64: 1, 128>}, {transform_indices = @transform_3, window_bounds = array<i64: 16, 128>}]} {
    %c0 = arith.constant 0 : index
    %c0_0 = arith.constant 0 : index
    %0 = vector.load %arg2[%c0, %c0_0] : memref<16x256xbf16, #tpu.memory_space<vmem>>, vector<16x256xbf16>
    %c0_1 = arith.constant 0 : index
    %c0_2 = arith.constant 0 : index
    %1 = vector.load %arg3[%c0_1, %c0_2] : memref<256x128xbf16, #tpu.memory_space<vmem>>, vector<256x128xbf16>
    %cst = arith.constant dense<0.000000e+00> : vector<16x128xf32>
    %2 = tpu.matmul %0, %1, %cst {dimension_numbers = #tpu.dot_dimension_numbers<[1], [0], [0], [1], [0, 0, 1, 1], [], []>} : vector<16x256xbf16>, vector<256x128xbf16>, vector<16x128xf32> -> vector<16x128xf32>
    %c0_3 = arith.constant 0 : index
    %c0_4 = arith.constant 0 : index
    %3 = vector.load %arg4[%c0_3, %c0_4] : memref<1x128xf32, #tpu.memory_space<vmem>>, vector<1x128xf32>
    %4 = vector.broadcast %3 : vector<1x128xf32> to vector<16x128xf32>
    %5 = arith.addf %2, %4 : vector<16x128xf32>
    %cst_5 = arith.constant 0.000000e+00 : f32
    %6 = vector.broadcast %cst_5 : f32 to vector<16x128xf32>
    %7 = arith.maximumf %5, %6 : vector<16x128xf32>
    %c0_6 = arith.constant 0 : index
    %c0_7 = arith.constant 0 : index
    %8 = vector.load %arg5[%c0_6, %c0_7] : memref<16x128xf32, #tpu.memory_space<vmem>>, vector<16x128xf32>
    tpu.vector_store %arg5[%c0_6, %c0_7], %7 {strides = array<i32>} : memref<16x128xf32, #tpu.memory_space<vmem>>, vector<16x128xf32>,
    return
  }
  func.func @transform_0(%arg0: i32, %arg1: i32) -> (i32, i32) {
    %c0_i32 = arith.constant 0 : i32
    %c0_i32_0 = arith.constant 0 : i32
    return %arg0, %c0_i32 : i32, i32
  }
  func.func @transform_1(%arg0: i32, %arg1: i32) -> (i32, i32) {
    %c0_i32 = arith.constant 0 : i32
    %c0_i32_0 = arith.constant 0 : i32
    return %c0_i32, %arg1 : i32, i32
  }
  func.func @transform_2(%arg0: i32, %arg1: i32) -> (i32, i32) {
    %c0_i32 = arith.constant 0 : i32
    %c0_i32_0 = arith.constant 0 : i32
    return %c0_i32, %arg1 : i32, i32
  }
  func.func @transform_3(%arg0: i32, %arg1: i32) -> (i32, i32) {
    %c0_i32 = arith.constant 0 : i32
    return %arg0, %arg1 : i32, i32
  }
}

</mosaic_0001>

<llo_original>
// kernel: tpu_custom_call.1
$region0: #{tpu_custom_call.1}
  #allocation0 [shape = 'u32[]', space=smem, size = 0x4, offset = 0x4, fixed_abs, tag = 'smem constant byte address 0x4 - core index']
  #allocation1 [shape = 'u32[72,128]{1,0:T(1,128)}', space=vmem, size = 0x9000, scoped, tag = 'internal scratch']
  %s0 = inlined_call_operand.hbm [shape: bf16[16,256], index: 0, kind: input, shape index: {}]
  %s1 = inlined_call_operand.hbm [shape: bf16[256,128], index: 1, kind: input, shape index: {}]
  %s2 = inlined_call_operand.vmem [shape: f32[1,128], index: 2, kind: input, shape index: {}]
  %s3 = inlined_call_operand.hbm [shape: f32[16,128], index: 3, kind: output, shape index: {}]
  %s4 = sld [smem:[#allocation0]]
  $region30: #{tpu_custom_call.1} parent=0
    _
  %s6 = ssub.s32 1, %s4
  %s7 = scalar_select 0, %s6, %s4
  $region1: #{tpu_custom_call.1} parent=0
    #allocation2 [shape = 'u8[8192]{0}', space=vmem, size = 0x2000, scoped, tag = 'input window, operand 0, single buffered']
    #allocation3 [shape = 's32[1]{0}', space=sflag, size = 0x4, scoped, tag = 'scoped memory for tpu_custom_call.1']
    #allocation4 [shape = 's32[1]{0}', space=sflag, size = 0x4, scoped, tag = 'scoped memory for tpu_custom_call.1']
    #allocation5 [shape = 'u8[65536]{0}', space=vmem, size = 0x10000, scoped, tag = 'input window, operand 1, single buffered']
    #allocation6 [shape = 's32[1]{0}', space=sflag, size = 0x4, scoped, tag = 'scoped memory for tpu_custom_call.1']
    #allocation7 [shape = 'u8[8192]{0}', space=vmem, size = 0x2000, scoped, tag = 'output window, operand 0, single buffered']
    %8 = vsyncpa [#allocation3], 0
    %9 = vsyncpa [#allocation6], 0
    %10 = vsyncpa [#allocation4], 0
    // Predicated region
    $region2: #{tpu_custom_call.1} parent=1 // pred_check
      _
    $region3: #{tpu_custom_call.1} parent=1 // pred_check_branch
      %12 = sbr.rel (0) target = $region5
    $region4: #{tpu_custom_call.1} parent=1 // pred_region
      %14 = vsyncadd [#allocation3], 0
      %s15 = sshll.u32 %s0, 4
      %s16 = int_to_ptr.hbm [resolvable:$true] %s15
      %s17 = sshll.u32 [#allocation2], 4
      %s18 = int_to_ptr.vmem [resolvable:$true] %s17
      %23 = dma.hbm_to_vmem [thread:$0]  %s16, 256, %s18, [#allocation3], 128, 128, 8
    $region5: #{tpu_custom_call.1} parent=1 // pred_fallthru
      _
    // Predicated region
    $region6: #{tpu_custom_call.1} parent=1 // pred_check
      _
    $region7: #{tpu_custom_call.1} parent=1 // pred_check_branch
      %25 = sbr.rel (0) target = $region9
    $region8: #{tpu_custom_call.1} parent=1 // pred_region
      %27 = vsyncadd [#allocation6], 0
      %s28 = sshll.u32 %s1, 4
      %s29 = int_to_ptr.hbm [resolvable:$true] %s28
      %s30 = sshll.u32 [#allocation5], 4
      %s31 = int_to_ptr.vmem [resolvable:$true] %s30
      %36 = dma.hbm_to_vmem [thread:$0]  %s29, 2048, %s31, [#allocation6], 64, 64, 4
    $region9: #{tpu_custom_call.1} parent=1 // pred_fallthru
      _
    // Predicated region
    $region10: #{tpu_custom_call.1} parent=1 // pred_check
      _
    $region11: #{tpu_custom_call.1} parent=1 // pred_check_branch
      %38 = sbr.rel (0) target = $region13
    $region12: #{tpu_custom_call.1} parent=1 // pred_region
      _
    $region13: #{tpu_custom_call.1} parent=1 // pred_fallthru
      _
    // Predicated region
    $region14: #{tpu_custom_call.1} parent=1 // pred_check
      _
    $region15: #{tpu_custom_call.1} parent=1 // pred_check_branch
      %40 = sbr.rel (0) target = $region17
    $region16: #{tpu_custom_call.1} parent=1 // pred_region
      %42 = dma.done [#allocation3], 256
    $region17: #{tpu_custom_call.1} parent=1 // pred_fallthru
      _
    // Predicated region
    $region18: #{tpu_custom_call.1} parent=1 // pred_check
      _
    $region19: #{tpu_custom_call.1} parent=1 // pred_check_branch
      %44 = sbr.rel (0) target = $region21
    $region20: #{tpu_custom_call.1} parent=1 // pred_region
      %46 = dma.done [#allocation6], 2048
    $region21: #{tpu_custom_call.1} parent=1 // pred_fallthru
      _
    %v47 = vld [vmem:[#allocation2] sm:$0xff]
    %v48 = vld [vmem:[#allocation2 + $0x8] sm:$0xff]
    %v49 = vld [vmem:[#allocation5] sm:$0xf]
    %v50 = vld [vmem:[#allocation5 + $0x4] sm:$0xf]
    %v51 = vld [vmem:[#allocation5 + $0x8] sm:$0xf]
    %v52 = vld [vmem:[#allocation5 + $0xc] sm:$0xf]
    %v53 = vld [vmem:[#allocation5 + $0x10] sm:$0xf]
    %v54 = vld [vmem:[#allocation5 + $0x14] sm:$0xf]
    %v55 = vld [vmem:[#allocation5 + $0x18] sm:$0xf]
    %v56 = vld [vmem:[#allocation5 + $0x1c] sm:$0xf]
    %v57 = vld [vmem:[#allocation5 + $0x20] sm:$0xf]
    %v58 = vld [vmem:[#allocation5 + $0x24] sm:$0xf]
    %v59 = vld [vmem:[#allocation5 + $0x28] sm:$0xf]
    %v60 = vld [vmem:[#allocation5 + $0x2c] sm:$0xf]
    %v61 = vld [vmem:[#allocation5 + $0x30] sm:$0xf]
    %v62 = vld [vmem:[#allocation5 + $0x34] sm:$0xf]
    %v63 = vld [vmem:[#allocation5 + $0x38] sm:$0xf]
    %v64 = vld [vmem:[#allocation5 + $0x3c] sm:$0xf]
    %v65 = vld [vmem:[#allocation5 + $0x40] sm:$0xf]
    %v66 = vld [vmem:[#allocation5 + $0x44] sm:$0xf]
    %v67 = vld [vmem:[#allocation5 + $0x48] sm:$0xf]
    %v68 = vld [vmem:[#allocation5 + $0x4c] sm:$0xf]
    %v69 = vld [vmem:[#allocation5 + $0x50] sm:$0xf]
    %v70 = vld [vmem:[#allocation5 + $0x54] sm:$0xf]
    %v71 = vld [vmem:[#allocation5 + $0x58] sm:$0xf]
    %v72 = vld [vmem:[#allocation5 + $0x5c] sm:$0xf]
    %v73 = vld [vmem:[#allocation5 + $0x60] sm:$0xf]
    %v74 = vld [vmem:[#allocation5 + $0x64] sm:$0xf]
    %v75 = vld [vmem:[#allocation5 + $0x68] sm:$0xf]
    %v76 = vld [vmem:[#allocation5 + $0x6c] sm:$0xf]
    %v77 = vld [vmem:[#allocation5 + $0x70] sm:$0xf]
    %v78 = vld [vmem:[#allocation5 + $0x74] sm:$0xf]
    %v79 = vld [vmem:[#allocation5 + $0x78] sm:$0xf]
    %v80 = vld [vmem:[#allocation5 + $0x7c] sm:$0xf]
    %v81 = vld [vmem:[%s2] sm:$0x1]
    %v83 = vperm.slane %v81, 0
    %v87 = vunpack.c.l.b16 %v47
    %v88 = vunpack.c.h.b16 %v47
    %v89 = vunpack.c.l.b16 %v48
    %v90 = vunpack.c.h.b16 %v48
    %v91 = vpack.c.b16 %v89, %v87
    %v92 = vpack.c.b16 %v90, %v88
    %v127 = vunpack.c.l.b16 %v49
    %v128 = vunpack.c.l.b16 %v50
    %v129 = vunpack.c.l.b16 %v51
    %v130 = vunpack.c.l.b16 %v52
    %v131 = vunpack.c.l.b16 %v53
    %v132 = vunpack.c.l.b16 %v54
    %v133 = vunpack.c.l.b16 %v55
    %v134 = vunpack.c.l.b16 %v56
    %v135 = vunpack.c.l.b16 %v57
    %v136 = vunpack.c.l.b16 %v58
    %v137 = vunpack.c.l.b16 %v59
    %v138 = vunpack.c.l.b16 %v60
    %v139 = vunpack.c.l.b16 %v61
    %v140 = vunpack.c.l.b16 %v62
    %v141 = vunpack.c.l.b16 %v63
    %v142 = vunpack.c.l.b16 %v64
    %v143 = vunpack.c.l.b16 %v65
    %v144 = vunpack.c.l.b16 %v66
    %v145 = vunpack.c.l.b16 %v67
    %v146 = vunpack.c.l.b16 %v68
    %v147 = vunpack.c.l.b16 %v69
    %v148 = vunpack.c.l.b16 %v70
    %v149 = vunpack.c.l.b16 %v71
    %v150 = vunpack.c.l.b16 %v72
    %v151 = vunpack.c.l.b16 %v73
    %v152 = vunpack.c.l.b16 %v74
    %v153 = vunpack.c.l.b16 %v75
    %v154 = vunpack.c.l.b16 %v76
    %v155 = vunpack.c.l.b16 %v77
    %v156 = vunpack.c.l.b16 %v78
    %v157 = vunpack.c.l.b16 %v79
    %v158 = vunpack.c.l.b16 %v80
    %v159 = vpack.c.b16 %v128, %v127
    %v160 = vpack.c.b16 %v130, %v129
    %v161 = vpack.c.b16 %v132, %v131
    %v162 = vpack.c.b16 %v134, %v133
    %v163 = vpack.c.b16 %v136, %v135
    %v164 = vpack.c.b16 %v138, %v137
    %v165 = vpack.c.b16 %v140, %v139
    %v166 = vpack.c.b16 %v142, %v141
    %v167 = vpack.c.b16 %v144, %v143
    %v168 = vpack.c.b16 %v146, %v145
    %v169 = vpack.c.b16 %v148, %v147
    %v170 = vpack.c.b16 %v150, %v149
    %v171 = vpack.c.b16 %v152, %v151
    %v172 = vpack.c.b16 %v154, %v153
    %v173 = vpack.c.b16 %v156, %v155
    %v174 = vpack.c.b16 %v158, %v157
    %191 = vmatpush.bf16.msra.mxu0 %v166
    %192 = vmatpush.bf16.msra.mxu0 %v165
    %193 = vmatpush.bf16.msra.mxu0 %v164
    %194 = vmatpush.bf16.msra.mxu0 %v163
    %195 = vmatpush.bf16.msra.mxu0 %v162
    %196 = vmatpush.bf16.msra.mxu0 %v161
    %197 = vmatpush.bf16.msra.mxu0 %v160
    %198 = vmatpush.bf16.msra.mxu0 %v159
    %199 = vmatmul.bf16.gmra.mxu0 %v91
    %v200 = vpop.f32.mrf.mxu0
    %v201 = vadd.f32 %v83, %v200
    %v202 = vpop.f32.mrf.mxu0
    %v203 = vadd.f32 %v83, %v202
    %204 = vdwg.mxu0
    %205 = vmatpush.bf16.msra.mxu0 %v174
    %206 = vmatpush.bf16.msra.mxu0 %v173
    %207 = vmatpush.bf16.msra.mxu0 %v172
    %208 = vmatpush.bf16.msra.mxu0 %v171
    %209 = vmatpush.bf16.msra.mxu0 %v170
    %210 = vmatpush.bf16.msra.mxu0 %v169
    %211 = vmatpush.bf16.msra.mxu0 %v168
    %212 = vmatpush.bf16.msra.mxu0 %v167
    %213 = vmatmul.bf16.gmra.mxu0 %v92
    %v214 = vpop.f32.mrf.mxu0
    %v215 = vadd.f32 %v201, %v214
    %v216 = vpop.f32.mrf.mxu0
    %v217 = vadd.f32 %v203, %v216
    %218 = vdwg.mxu0
    %v219 = vmax.f32 %v215, 0.0
    %v220 = vmax.f32 %v217, 0.0
    %221 = vst [vmem:[#allocation7] sm:$0xff] %v219
    %222 = vst [vmem:[#allocation7 + $0x8] sm:$0xff] %v220
    // Predicated region
    $region22: #{tpu_custom_call.1} parent=1 // pred_check
      _
    $region23: #{tpu_custom_call.1} parent=1 // pred_check_branch
      %224 = sbr.rel (0) target = $region25
    $region24: #{tpu_custom_call.1} parent=1 // pred_region
      %226 = vsyncadd [#allocation4], 0
      %s227 = sshll.u32 [#allocation7], 4
      %s228 = int_to_ptr.vmem [resolvable:$true] %s227
      %s229 = sshll.u32 %s3, 4
      %s230 = int_to_ptr.hbm [resolvable:$true] %s229
      %235 = dma.vmem_to_hbm [thread:$0]  %s228, 256, %s230, [#allocation4], 128, 128, 8
    $region25: #{tpu_custom_call.1} parent=1 // pred_fallthru
      _
    // Predicated region
    $region26: #{tpu_custom_call.1} parent=1 // pred_check
      _
    $region27: #{tpu_custom_call.1} parent=1 // pred_check_branch
      %237 = sbr.rel (0) target = $region29
    $region28: #{tpu_custom_call.1} parent=1 // pred_region
      %239 = dma.done [#allocation4], 256
    $region29: #{tpu_custom_call.1} parent=1 // pred_fallthru
      _
    %240 = vsyncpa [#allocation3], 1
    %241 = vsyncpa [#allocation6], 1
    %242 = vsyncpa [#allocation4], 1

</llo_original>
